<compile_context>
chip_gen: v6e
topology: v6e:2x2x1
jax: 0.10.0
libtpu: 0.0.40
codegen_flags: <defaults>
</compile_context>

<pallas_src>
import functools

import jax
import jax.numpy as jnp
from jax.experimental import pallas as pl
from jax.experimental.pallas import tpu as pltpu


_SUBLANE = 8      # f32 sublane granularity
_LANE = 128       # lane granularity
_TILE_C_CAP = 64  # streamed-path channel-tile cap


def _pick_tile(dim, gran, cap):
    """Largest power-of-two multiple of `gran` dividing `dim`, <= cap.

    Falls back to the full extent (always legal for a BlockSpec) when `dim`
    is not a multiple of `gran`.
    """
    if dim % gran != 0:
        return dim
    t = gran
    while t * 2 <= cap and dim % (t * 2) == 0:
        t *= 2
    return t


def _vmem_budgets():
    """Generation-aware (vmem_limit, fast_block_budget, stream_block_budget)."""
    try:
        cap = int(getattr(pltpu.get_tpu_info(), "vmem_capacity_bytes"))
    except Exception:
        cap = 64 << 20  # conservative: v7x per-TensorCore VMEM
    vmem_limit = min((cap * 3) // 4, 112 << 20)       # ~48 MiB v7x, ~96 MiB v5e/v6e
    fast_block_budget = vmem_limit // 8               # ~6 MiB v7x, ~12 MiB v5e/v6e
    stream_block_budget = min(8 << 20, vmem_limit // 12)  # 4-8 MiB streamed blocks
    return vmem_limit, fast_block_budget, stream_block_budget


# ------------------------- kernels -------------------------

def _bn_single_pass_kernel(x_ref, gamma_ref, beta_ref, o_ref, *, eps, inv_m):
    """Whole (N, TILE_C, HW) slab resident.

    Chunked over the batch axis so live f32 temporaries stay ~(TILE_C, HW).
    Uses the numerically robust two-pass variance (mean first, then
    sum (x - mean)^2) since the data is already resident in VMEM.
    """
    n_blk = x_ref.shape[0]
    tc = x_ref.shape[1]
    unroll = n_blk <= 8

    zero = jnp.zeros((tc, 1), jnp.float32)

    def sum_body(i, s):
        xi = x_ref[i].astype(jnp.float32)                 # (TC, HW)
        return s + jnp.sum(xi, axis=-1, keepdims=True)

    s = jax.lax.fori_loop(0, n_blk, sum_body, zero, unroll=unroll)
    mean = s * inv_m                                      # (TC, 1)

    def var_body(i, v):
        d = x_ref[i].astype(jnp.float32) - mean           # (TC, HW)
        return v + jnp.sum(d * d, axis=-1, keepdims=True)

    v = jax.lax.fori_loop(0, n_blk, var_body, zero, unroll=unroll)
    var = v * inv_m                                       # biased variance

    gamma = gamma_ref[...].astype(jnp.float32)            # (TC, 1)
    beta = beta_ref[...].astype(jnp.float32)              # (TC, 1)
    scale = gamma * jax.lax.rsqrt(var + eps)              # (TC, 1)
    shift = beta - mean * scale                           # (TC, 1)

    def apply_body(i, carry):
        xi = x_ref[i].astype(jnp.float32)
        o_ref[i] = (xi * scale + shift).astype(o_ref.dtype)
        return carry

    jax.lax.fori_loop(0, n_blk, apply_body, 0, unroll=unroll)


def _bn_stats_fold_kernel(x_ref, gamma_ref, beta_ref, scale_ref, shift_ref,
                          acc_s, acc_q, *, eps, inv_m):
    """Pass 1: accumulate per-channel sum / sumsq, fold affine at finalize."""
    nb = pl.program_id(1)
    sb = pl.program_id(2)

    @pl.when((nb == 0) & (sb == 0))
    def _():
        acc_s[...] = jnp.zeros_like(acc_s)
        acc_q[...] = jnp.zeros_like(acc_q)

    x = x_ref[0].astype(jnp.float32)                           # (TC, TS)
    acc_s[...] += jnp.sum(x, axis=-1, keepdims=True)           # (TC, 1)
    acc_q[...] += jnp.sum(x * x, axis=-1, keepdims=True)       # (TC, 1)

    @pl.when((nb == pl.num_programs(1) - 1) & (sb == pl.num_programs(2) - 1))
    def _():
        mean = acc_s[...] * inv_m
        var = jnp.maximum(acc_q[...] * inv_m - mean * mean, 0.0)  # clamp fp error
        gamma = gamma_ref[...].astype(jnp.float32)
        beta = beta_ref[...].astype(jnp.float32)
        scale = gamma * jax.lax.rsqrt(var + eps)
        scale_ref[...] = scale
        shift_ref[...] = beta - mean * scale


def _bn_apply_kernel(x_ref, scale_ref, shift_ref, o_ref):
    """Pass 2: y = x * scale + shift (folded affine), fully streamed."""
    x = x_ref[...].astype(jnp.float32)               # (1, TC, TS)
    scale = scale_ref[...].astype(jnp.float32)       # (TC, 1)
    shift = shift_ref[...].astype(jnp.float32)       # (TC, 1)
    o_ref[...] = (x * scale[None] + shift[None]).astype(o_ref.dtype)


# ------------------------- wrapper -------------------------

def batchnorm2d_train_pallas(x_nchw, gamma, beta, *, eps: float = 1e-5,
                             force_two_pass: bool = False):
    """Training-mode BatchNorm2d on an NCHW tensor via Pallas TPU kernels."""
    n, c, h, w = x_nchw.shape
    hw = h * w
    m = n * hw
    inv_m = 1.0 / float(m)
    itemsize = jnp.dtype(x_nchw.dtype).itemsize

    vmem_limit, fast_budget, stream_budget = _vmem_budgets()

    # Pure reshape (no transpose, no extra HBM traffic): channels on sublanes,
    # spatial on lanes.  When hw % 128 != 0 the lane padding waste is accepted.
    x3 = x_nchw.reshape(n, c, hw)
    gamma2 = gamma.reshape(c, 1)
    beta2 = beta.reshape(c, 1)

    # ---- fast path: full per-channel slab resident, 1 read + 1 write ----
    per_channel_bytes = n * hw * itemsize
    if c % _SUBLANE != 0:
        sp_tile_c = c  # full-extent channel block (always legal)
    else:
        sp_tile_c = _SUBLANE
        while (sp_tile_c * 2 <= c and c % (sp_tile_c * 2) == 0
               and (sp_tile_c * 2) * per_channel_bytes <= fast_budget):
            sp_tile_c *= 2
    single_pass_ok = (sp_tile_c * per_channel_bytes <= fast_budget
                      and not force_two_pass)

    if single_pass_ok:
        num_c = c // sp_tile_c
        # Guarantee >=2 channel tiles so the "parallel" axis can shard across
        # v7x's two TensorCores.
        if num_c == 1 and c % (2 * _SUBLANE) == 0:
            sp_tile_c = c // 2
            num_c = 2

        kernel = functools.partial(_bn_single_pass_kernel, eps=eps, inv_m=inv_m)
        y3 = pl.pallas_call(
            kernel,
            out_shape=jax.ShapeDtypeStruct((n, c, hw), x_nchw.dtype),
            grid_spec=pltpu.PrefetchScalarGridSpec(
                num_scalar_prefetch=0,
                grid=(num_c,),
                in_specs=[
                    pl.BlockSpec((n, sp_tile_c, hw), lambda ci: (0, ci, 0)),
                    pl.BlockSpec((sp_tile_c, 1), lambda ci: (ci, 0)),
                    pl.BlockSpec((sp_tile_c, 1), lambda ci: (ci, 0)),
                ],
                out_specs=pl.BlockSpec((n, sp_tile_c, hw), lambda ci: (0, ci, 0)),
            ),
            compiler_params=pltpu.CompilerParams(
                dimension_semantics=("parallel",),
                vmem_limit_bytes=vmem_limit),
        )(x3, gamma2, beta2)
        return y3.reshape(n, c, h, w)

    # ---- fallback: two streamed passes (stats+fold, then apply) ----
    tile_c = c if c % _SUBLANE != 0 else _pick_tile(c, _SUBLANE, _TILE_C_CAP)
    num_c = c // tile_c
    if num_c == 1 and c % (2 * _SUBLANE) == 0:
        tile_c = c // 2
        num_c = 2

    tile_s_cap = max(_LANE, stream_budget // max(1, tile_c * itemsize))
    tile_s = _pick_tile(hw, _LANE, tile_s_cap)
    num_s = hw // tile_s

    stats_kernel = functools.partial(_bn_stats_fold_kernel, eps=eps, inv_m=inv_m)
    scale2, shift2 = pl.pallas_call(
        stats_kernel,
        out_shape=(jax.ShapeDtypeStruct((c, 1), jnp.float32),
                   jax.ShapeDtypeStruct((c, 1), jnp.float32)),
        grid_spec=pltpu.PrefetchScalarGridSpec(
            num_scalar_prefetch=0,
            grid=(num_c, n, num_s),
            in_specs=[
                pl.BlockSpec((1, tile_c, tile_s), lambda ci, nb, sb: (nb, ci, sb)),
                pl.BlockSpec((tile_c, 1), lambda ci, nb, sb: (ci, 0)),
                pl.BlockSpec((tile_c, 1), lambda ci, nb, sb: (ci, 0)),
            ],
            out_specs=(
                pl.BlockSpec((tile_c, 1), lambda ci, nb, sb: (ci, 0)),
                pl.BlockSpec((tile_c, 1), lambda ci, nb, sb: (ci, 0)),
            ),
            scratch_shapes=[pltpu.VMEM((tile_c, 1), jnp.float32),
                            pltpu.VMEM((tile_c, 1), jnp.float32)],
        ),
        compiler_params=pltpu.CompilerParams(
            dimension_semantics=("parallel", "arbitrary", "arbitrary"),
            vmem_limit_bytes=vmem_limit),
    )(x3, gamma2, beta2)

    y3 = pl.pallas_call(
        _bn_apply_kernel,
        out_shape=jax.ShapeDtypeStruct((n, c, hw), x_nchw.dtype),
        grid_spec=pltpu.PrefetchScalarGridSpec(
            num_scalar_prefetch=0,
            grid=(num_c, n, num_s),
            in_specs=[
                pl.BlockSpec((1, tile_c, tile_s), lambda ci, nb, sb: (nb, ci, sb)),
                pl.BlockSpec((tile_c, 1), lambda ci, nb, sb: (ci, 0)),
                pl.BlockSpec((tile_c, 1), lambda ci, nb, sb: (ci, 0)),
            ],
            out_specs=pl.BlockSpec((1, tile_c, tile_s),
                                   lambda ci, nb, sb: (nb, ci, sb)),
        ),
        compiler_params=pltpu.CompilerParams(
            dimension_semantics=("parallel", "parallel", "arbitrary"),
            vmem_limit_bytes=vmem_limit),
    )(x3, scale2, shift2)

    return y3.reshape(n, c, h, w)


# ------------------------- Switchable BN module -------------------------

class SwitchableBatchNorm2dPallas:
    """JAX/Pallas port of SwitchableBatchNorm2d.

    Holds one (gamma, beta) pair per entry of num_features_list; forward()
    applies the BN whose index corresponds to the max width multiplier
    (exactly what the PyTorch module does with FLAGS.width_mult_list).
    """

    def __init__(self, num_features_list, width_mult_list):
        self.num_features_list = list(num_features_list)
        self.width_mult_list = list(width_mult_list)
        self.num_features = max(num_features_list)
        self.width_mult = max(width_mult_list)

        # Deterministic synthetic parameters (one BN per width).  PyTorch init
        # is weight=1, bias=0; perturb deterministically so the affine path is
        # actually exercised.
        self.params = []
        for nf in self.num_features_list:
            g = 1.0 + 0.1 * jnp.arange(nf, dtype=jnp.float32)
            b = 0.05 * jnp.arange(nf, dtype=jnp.float32)
            self.params.append((g, b))
        self.eps = 1e-5

    def forward(self, x_nchw):
        idx = self.width_mult_list.index(self.width_mult)
        gamma, beta = self.params[idx]
        assert x_nchw.shape[1] == self.num_features_list[idx]
        return batchnorm2d_train_pallas(x_nchw, gamma, beta, eps=self.eps)

    __call__ = forward


# ------------------------- reference (plain JAX) -------------------------

def _bn_ref(x_nchw, gamma, beta, eps=1e-5):
    mean = jnp.mean(x_nchw, axis=(0, 2, 3), keepdims=True)
    var = jnp.mean((x_nchw - mean) ** 2, axis=(0, 2, 3), keepdims=True)  # biased
    g = gamma.reshape(1, -1, 1, 1)
    b = beta.reshape(1, -1, 1, 1)
    return (x_nchw - mean) * jax.lax.rsqrt(var + eps) * g + b


# ------------------------- main -------------------------

if __name__ == "__main__":
    key = jax.random.PRNGKey(0)

    # Slimmable config: widths 0.5x and 1.0x -> channel counts [2, 4].
    width_mult_list = [0.5, 1.0]
    num_features_list = [2, 4]

    module = SwitchableBatchNorm2dPallas(num_features_list, width_mult_list)

    # Input at the max width (idx selects the 4-channel BN), NCHW.
    n, c, h, w = 2, 4, 16, 16
    x = jax.random.normal(key, (n, c, h, w), dtype=jnp.float32)

    # Fast (single-pass) path.
    y = jax.block_until_ready(module(x))

    gamma, beta = module.params[width_mult_list.index(max(width_mult_list))]
    y_ref = _bn_ref(x, gamma, beta)
    assert y.shape == x.shape and y.dtype == x.dtype
    assert jnp.max(jnp.abs(y - y_ref)) < 1e-4

    # Also exercise the streamed two-pass (large-activation) path on the same input.
    y2 = jax.block_until_ready(
        batchnorm2d_train_pallas(x, gamma, beta, eps=module.eps, force_two_pass=True))
    assert jnp.max(jnp.abs(y2 - y_ref)) < 1e-4

    print("KERNEL_OK")
</pallas_src>

<mosaic_0001>
module attributes {stable_mosaic.version = 11 : i64} {
  func.func @_bn_single_pass_kernel(%arg0: i32, %arg1: memref<2x4x256xf32, #tpu.memory_space<vmem>>, %arg2: memref<4x1xf32, #tpu.memory_space<vmem>>, %arg3: memref<4x1xf32, #tpu.memory_space<vmem>>, %arg4: memref<2x4x256xf32, #tpu.memory_space<vmem>>) attributes {dimension_semantics = [#tpu.dimension_semantics<parallel>], iteration_bounds = array<i64: 1>, scalar_prefetch = 0 : i64, scratch_operands = 0 : i64, tpu.core_type = #tpu.core_type<tc>, window_params = [{transform_indices = @transform_0, window_bounds = array<i64: 2, 4, 256>}, {transform_indices = @transform_1, window_bounds = array<i64: 4, 1>}, {transform_indices = @transform_2, window_bounds = array<i64: 4, 1>}, {transform_indices = @transform_3, window_bounds = array<i64: 2, 4, 256>}]} {
    %cst = arith.constant 0.000000e+00 : f32
    %0 = vector.broadcast %cst : f32 to vector<4x1xf32>
    %c0_i32 = arith.constant 0 : i32
    %1 = arith.index_cast %c0_i32 : i32 to index
    %c0 = arith.constant 0 : index
    %c0_0 = arith.constant 0 : index
    %2 = vector.load %arg1[%1, %c0, %c0_0] : memref<2x4x256xf32, #tpu.memory_space<vmem>>, vector<1x4x256xf32>
    %3 = vector.shape_cast %2 : vector<1x4x256xf32> to vector<4x256xf32>
    %cst_1 = arith.constant dense<0.000000e+00> : vector<4xf32>
    %4 = vector.multi_reduction <add>, %3, %cst_1 [1] : vector<4x256xf32> to vector<4xf32>
    %5 = vector.shape_cast %4 : vector<4xf32> to vector<4x1xf32>
    %6 = arith.addf %0, %5 : vector<4x1xf32>
    %c1_i32 = arith.constant 1 : i32
    %7 = arith.index_cast %c1_i32 : i32 to index
    %c0_2 = arith.constant 0 : index
    %c0_3 = arith.constant 0 : index
    %8 = vector.load %arg1[%7, %c0_2, %c0_3] : memref<2x4x256xf32, #tpu.memory_space<vmem>>, vector<1x4x256xf32>
    %9 = vector.shape_cast %8 : vector<1x4x256xf32> to vector<4x256xf32>
    %cst_4 = arith.constant dense<0.000000e+00> : vector<4xf32>
    %10 = vector.multi_reduction <add>, %9, %cst_4 [1] : vector<4x256xf32> to vector<4xf32>
    %11 = vector.shape_cast %10 : vector<4xf32> to vector<4x1xf32>
    %12 = arith.addf %6, %11 : vector<4x1xf32>
    %c2_i32 = arith.constant 2 : i32
    %cst_5 = arith.constant 0.001953125 : f32
    %13 = vector.broadcast %cst_5 : f32 to vector<4x1xf32>
    %14 = arith.mulf %12, %13 : vector<4x1xf32>
    %c0_i32_6 = arith.constant 0 : i32
    %15 = arith.index_cast %c0_i32_6 : i32 to index
    %c0_7 = arith.constant 0 : index
    %c0_8 = arith.constant 0 : index
    %16 = vector.load %arg1[%15, %c0_7, %c0_8] : memref<2x4x256xf32, #tpu.memory_space<vmem>>, vector<1x4x256xf32>
    %17 = vector.shape_cast %16 : vector<1x4x256xf32> to vector<4x256xf32>
    %18 = vector.broadcast %14 : vector<4x1xf32> to vector<4x256xf32>
    %19 = arith.subf %17, %18 : vector<4x256xf32>
    %20 = arith.mulf %19, %19 : vector<4x256xf32>
    %cst_9 = arith.constant dense<0.000000e+00> : vector<4xf32>
    %21 = vector.multi_reduction <add>, %20, %cst_9 [1] : vector<4x256xf32> to vector<4xf32>
    %22 = vector.shape_cast %21 : vector<4xf32> to vector<4x1xf32>
    %23 = arith.addf %0, %22 : vector<4x1xf32>
    %c1_i32_10 = arith.constant 1 : i32
    %24 = arith.index_cast %c1_i32_10 : i32 to index
    %c0_11 = arith.constant 0 : index
    %c0_12 = arith.constant 0 : index
    %25 = vector.load %arg1[%24, %c0_11, %c0_12] : memref<2x4x256xf32, #tpu.memory_space<vmem>>, vector<1x4x256xf32>
    %26 = vector.shape_cast %25 : vector<1x4x256xf32> to vector<4x256xf32>
    %27 = vector.broadcast %14 : vector<4x1xf32> to vector<4x256xf32>
    %28 = arith.subf %26, %27 : vector<4x256xf32>
    %29 = arith.mulf %28, %28 : vector<4x256xf32>
    %cst_13 = arith.constant dense<0.000000e+00> : vector<4xf32>
    %30 = vector.multi_reduction <add>, %29, %cst_13 [1] : vector<4x256xf32> to vector<4xf32>
    %31 = vector.shape_cast %30 : vector<4xf32> to vector<4x1xf32>
    %32 = arith.addf %23, %31 : vector<4x1xf32>
    %c2_i32_14 = arith.constant 2 : i32
    %cst_15 = arith.constant 0.001953125 : f32
    %33 = vector.broadcast %cst_15 : f32 to vector<4x1xf32>
    %34 = arith.mulf %32, %33 : vector<4x1xf32>
    %c0_16 = arith.constant 0 : index
    %c0_17 = arith.constant 0 : index
    %35 = vector.load %arg2[%c0_16, %c0_17] : memref<4x1xf32, #tpu.memory_space<vmem>>, vector<4x1xf32>
    %c0_18 = arith.constant 0 : index
    %c0_19 = arith.constant 0 : index
    %36 = vector.load %arg3[%c0_18, %c0_19] : memref<4x1xf32, #tpu.memory_space<vmem>>, vector<4x1xf32>
    %cst_20 = arith.constant 9.99999974E-6 : f32
    %37 = vector.broadcast %cst_20 : f32 to vector<4x1xf32>
    %38 = arith.addf %34, %37 : vector<4x1xf32>
    %39 = math.rsqrt %38 : vector<4x1xf32>
    %40 = arith.mulf %35, %39 : vector<4x1xf32>
    %41 = arith.mulf %14, %40 : vector<4x1xf32>
    %42 = arith.subf %36, %41 : vector<4x1xf32>
    %c0_i32_21 = arith.constant 0 : i32
    %43 = arith.index_cast %c0_i32_21 : i32 to index
    %c0_22 = arith.constant 0 : index
    %c0_23 = arith.constant 0 : index
    %44 = vector.load %arg1[%43, %c0_22, %c0_23] : memref<2x4x256xf32, #tpu.memory_space<vmem>>, vector<1x4x256xf32>
    %45 = vector.shape_cast %44 : vector<1x4x256xf32> to vector<4x256xf32>
    %46 = vector.broadcast %40 : vector<4x1xf32> to vector<4x256xf32>
    %47 = arith.mulf %45, %46 : vector<4x256xf32>
    %48 = vector.broadcast %42 : vector<4x1xf32> to vector<4x256xf32>
    %49 = arith.addf %47, %48 : vector<4x256xf32>
    %50 = arith.index_cast %c0_i32_21 : i32 to index
    %c0_24 = arith.constant 0 : index
    %c0_25 = arith.constant 0 : index
    %51 = vector.load %arg4[%50, %c0_24, %c0_25] : memref<2x4x256xf32, #tpu.memory_space<vmem>>, vector<1x4x256xf32>
    %52 = vector.shape_cast %51 : vector<1x4x256xf32> to vector<4x256xf32>
    %53 = vector.shape_cast %49 : vector<4x256xf32> to vector<1x4x256xf32>
    tpu.vector_store %arg4[%50, %c0_24, %c0_25], %53 {strides = array<i32>} : memref<2x4x256xf32, #tpu.memory_space<vmem>>, vector<1x4x256xf32>,
    %c1_i32_26 = arith.constant 1 : i32
    %54 = arith.index_cast %c1_i32_26 : i32 to index
    %c0_27 = arith.constant 0 : index
    %c0_28 = arith.constant 0 : index
    %55 = vector.load %arg1[%54, %c0_27, %c0_28] : memref<2x4x256xf32, #tpu.memory_space<vmem>>, vector<1x4x256xf32>
    %56 = vector.shape_cast %55 : vector<1x4x256xf32> to vector<4x256xf32>
    %57 = vector.broadcast %40 : vector<4x1xf32> to vector<4x256xf32>
    %58 = arith.mulf %56, %57 : vector<4x256xf32>
    %59 = vector.broadcast %42 : vector<4x1xf32> to vector<4x256xf32>
    %60 = arith.addf %58, %59 : vector<4x256xf32>
    %61 = arith.index_cast %c1_i32_26 : i32 to index
    %c0_29 = arith.constant 0 : index
    %c0_30 = arith.constant 0 : index
    %62 = vector.load %arg4[%61, %c0_29, %c0_30] : memref<2x4x256xf32, #tpu.memory_space<vmem>>, vector<1x4x256xf32>
    %63 = vector.shape_cast %62 : vector<1x4x256xf32> to vector<4x256xf32>
    %64 = vector.shape_cast %60 : vector<4x256xf32> to vector<1x4x256xf32>
    tpu.vector_store %arg4[%61, %c0_29, %c0_30], %64 {strides = array<i32>} : memref<2x4x256xf32, #tpu.memory_space<vmem>>, vector<1x4x256xf32>,
    %c2_i32_31 = arith.constant 2 : i32
    return
  }
  func.func @transform_0(%arg0: i32) -> (i32, i32, i32) {
    %c0_i32 = arith.constant 0 : i32
    %c0_i32_0 = arith.constant 0 : i32
    %c0_i32_1 = arith.constant 0 : i32
    return %c0_i32, %arg0, %c0_i32_0 : i32, i32, i32
  }
  func.func @transform_1(%arg0: i32) -> (i32, i32) {
    %c0_i32 = arith.constant 0 : i32
    %c0_i32_0 = arith.constant 0 : i32
    return %arg0, %c0_i32 : i32, i32
  }
  func.func @transform_2(%arg0: i32) -> (i32, i32) {
    %c0_i32 = arith.constant 0 : i32
    %c0_i32_0 = arith.constant 0 : i32
    return %arg0, %c0_i32 : i32, i32
  }
  func.func @transform_3(%arg0: i32) -> (i32, i32, i32) {
    %c0_i32 = arith.constant 0 : i32
    %c0_i32_0 = arith.constant 0 : i32
    %c0_i32_1 = arith.constant 0 : i32
    return %c0_i32, %arg0, %c0_i32_0 : i32, i32, i32
  }
}

</mosaic_0001>

<llo_original>
// kernel: tpu_custom_call.1
$region0: #{tpu_custom_call.1}
  #allocation0 [shape = 'u32[]', space=smem, size = 0x4, offset = 0x4, fixed_abs, tag = 'smem constant byte address 0x4 - core index']
  #allocation1 [shape = 'u32[144,128]{1,0:T(1,128)}', space=vmem, size = 0x12000, scoped, tag = 'internal scratch']
  %s0 = inlined_call_operand.hbm [shape: f32[2,4,256], index: 0, kind: input, shape index: {}]
  %s1 = inlined_call_operand.vmem [shape: f32[4,1], index: 1, kind: input, shape index: {}]
  %s2 = inlined_call_operand.vmem [shape: f32[4,1], index: 2, kind: input, shape index: {}]
  %s3 = inlined_call_operand.hbm [shape: f32[2,4,256], index: 3, kind: output, shape index: {}]
  %s4 = sld [smem:[#allocation0]]
  $region26: #{tpu_custom_call.1} parent=0
    _
  %s6 = ssub.s32 1, %s4
  %s7 = scalar_select 0, %s6, %s4
  $region1: #{tpu_custom_call.1} parent=0
    #allocation2 [shape = 'u8[8192]{0}', space=vmem, size = 0x2000, scoped, tag = 'input window, operand 0, single buffered']
    #allocation3 [shape = 's32[1]{0}', space=sflag, size = 0x4, scoped, tag = 'scoped memory for tpu_custom_call.1']
    #allocation4 [shape = 's32[1]{0}', space=sflag, size = 0x4, scoped, tag = 'scoped memory for tpu_custom_call.1']
    #allocation5 [shape = 'u8[8192]{0}', space=vmem, size = 0x2000, scoped, tag = 'output window, operand 0, single buffered']
    %8 = vsyncpa [#allocation3], 0
    %9 = vsyncpa [#allocation4], 0
    // Predicated region
    $region2: #{tpu_custom_call.1} parent=1 // pred_check
      _
    $region3: #{tpu_custom_call.1} parent=1 // pred_check_branch
      %11 = sbr.rel (0) target = $region5
    $region4: #{tpu_custom_call.1} parent=1 // pred_region
      %s13 = ssub.s32 256, 256
      %14 = vsyncadd [#allocation3], %s13
      %s15 = sshll.u32 [#allocation2], 4
      %s16 = int_to_ptr.vmem [resolvable:$true] %s15
      %21 = dma.hbm_to_vmem [thread:$0]  %s0, 256, %s16, [#allocation3], 128, 128, 8
    $region5: #{tpu_custom_call.1} parent=1 // pred_fallthru
      _
    // Predicated region
    $region6: #{tpu_custom_call.1} parent=1 // pred_check
      _
    $region7: #{tpu_custom_call.1} parent=1 // pred_check_branch
      %23 = sbr.rel (0) target = $region9
    $region8: #{tpu_custom_call.1} parent=1 // pred_region
      _
    $region9: #{tpu_custom_call.1} parent=1 // pred_fallthru
      _
    // Predicated region
    $region10: #{tpu_custom_call.1} parent=1 // pred_check
      _
    $region11: #{tpu_custom_call.1} parent=1 // pred_check_branch
      %25 = sbr.rel (0) target = $region13
    $region12: #{tpu_custom_call.1} parent=1 // pred_region
      _
    $region13: #{tpu_custom_call.1} parent=1 // pred_fallthru
      _
    // Predicated region
    $region14: #{tpu_custom_call.1} parent=1 // pred_check
      _
    $region15: #{tpu_custom_call.1} parent=1 // pred_check_branch
      %27 = sbr.rel (0) target = $region17
    $region16: #{tpu_custom_call.1} parent=1 // pred_region
      %28 = dma.done [#allocation3], 256
    $region17: #{tpu_custom_call.1} parent=1 // pred_fallthru
      _
    %v29 = vld [vmem:[#allocation2] sm:$0xff]
    %v31 = vcombine.high %v29, %v29
    %vm33 = vcmask 1043456
    %v34 = vsel %vm33, %v29, 0.0
    %v35 = vsel %vm33, %v31, 0.0
    %v36 = vadd.f32 %v34, %v35
    %37 = vadd.xlane.f32.xlu0 %v36
    %v38 = vpop.xlane.xlu0 %37
    %v39 = vadd.f32 %v38, 0.0
    %s40 = scalar_lea.vmem [#allocation2], 8
    %v41 = vld [vmem:[%s40] sm:$0xff]
    %v43 = vcombine.high %v41, %v41
    %v45 = vsel %vm33, %v41, 0.0
    %v46 = vsel %vm33, %v43, 0.0
    %v47 = vadd.f32 %v45, %v46
    %48 = vadd.xlane.f32.xlu0 %v47
    %v49 = vpop.xlane.xlu0 %48
    %v50 = vadd.f32 %v39, %v49
    %v51 = vmul.f32 %v50, 0.001953125
    %v54 = vunpack.c.l.s4 839922192
    %v55 = vunpack.c.0.s8 %v54
    %v56 = vlaneseq
    %v57 = vshrl.u32 %v56, 7
    %v58 = vsub.s32 %v55, %v57
    %v59 = vrot.slane %v51, %v58
    %v61 = vsub.f32 %v29, %v59
    %v62 = vmul.f32 %v61, %v61
    %v64 = vcombine.high %v62, %v62
    %v66 = vsel %vm33, %v62, 0.0
    %v67 = vsel %vm33, %v64, 0.0
    %v68 = vadd.f32 %v66, %v67
    %69 = vadd.xlane.f32.xlu0 %v68
    %v70 = vpop.xlane.xlu0 %69
    %v71 = vadd.f32 %v70, 0.0
    %v72 = vsub.f32 %v41, %v59
    %v73 = vmul.f32 %v72, %v72
    %v75 = vcombine.high %v73, %v73
    %v77 = vsel %vm33, %v73, 0.0
    %v78 = vsel %vm33, %v75, 0.0
    %v79 = vadd.f32 %v77, %v78
    %80 = vadd.xlane.f32.xlu0 %v79
    %v81 = vpop.xlane.xlu0 %80
    %v82 = vadd.f32 %v71, %v81
    %v83 = vmul.f32 %v82, 0.001953125
    %v84 = vld [vmem:[%s1] sm:$0xf]
    %v85 = vld [vmem:[%s2] sm:$0xf]
    %v86 = vadd.f32 %v83, 1e-05
    %v87 = vrsqrt.pop %v86
    %v88 = vmul.f32 %v84, %v87
    %v89 = vmul.f32 %v51, %v88
    %v90 = vsub.f32 %v85, %v89
    %92 = vset.pattern.permute.xlu0 0
    %93 = vperm.xlu0 %92, %v88
    %v94 = vpop.permute.xlu0 %93
    %v96 = vunpack.c.l.s4 839922192
    %v97 = vunpack.c.0.s8 %v96
    %v98 = vlaneseq
    %v99 = vshrl.u32 %v98, 7
    %v100 = vsub.s32 %v97, %v99
    %v101 = vrot.slane %v94, %v100
    %v103 = vmul.f32 %v29, %v101
    %105 = vset.pattern.permute.xlu0 0
    %106 = vperm.xlu0 %105, %v90
    %v107 = vpop.permute.xlu0 %106
    %v109 = vunpack.c.l.s4 839922192
    %v110 = vunpack.c.0.s8 %v109
    %v111 = vlaneseq
    %v112 = vshrl.u32 %v111, 7
    %v113 = vsub.s32 %v110, %v112
    %v114 = vrot.slane %v107, %v113
    %v116 = vadd.f32 %v103, %v114
    %117 = vst [vmem:[#allocation5] sm:$0xff] %v116
    %v118 = vld [vmem:[%s40] sm:$0xff]
    %v119 = vmul.f32 %v118, %v101
    %v120 = vadd.f32 %v119, %v114
    %s121 = scalar_lea.vmem [#allocation5], 8
    %122 = vst [vmem:[%s121] sm:$0xff] %v120
    // Predicated region
    $region18: #{tpu_custom_call.1} parent=1 // pred_check
      _
    $region19: #{tpu_custom_call.1} parent=1 // pred_check_branch
      %124 = sbr.rel (0) target = $region21
    $region20: #{tpu_custom_call.1} parent=1 // pred_region
      %s126 = ssub.s32 256, 256
      %127 = vsyncadd [#allocation4], %s126
      %s128 = sshll.u32 [#allocation5], 4
      %s129 = int_to_ptr.vmem [resolvable:$true] %s128
      %134 = dma.vmem_to_hbm [thread:$0]  %s129, 256, %s3, [#allocation4], 128, 128, 8
    $region21: #{tpu_custom_call.1} parent=1 // pred_fallthru
      _
    // Predicated region
    $region22: #{tpu_custom_call.1} parent=1 // pred_check
      _
    $region23: #{tpu_custom_call.1} parent=1 // pred_check_branch
      %136 = sbr.rel (0) target = $region25
    $region24: #{tpu_custom_call.1} parent=1 // pred_region
      %137 = dma.done [#allocation4], 256
    $region25: #{tpu_custom_call.1} parent=1 // pred_fallthru
      _
    %138 = vsyncpa [#allocation3], 1
    %139 = vsyncpa [#allocation4], 1

</llo_original>
